<compile_context>
chip_gen: v5e
topology: v5e:2x2
jax: 0.10.0
libtpu: 0.0.40
codegen_flags: <defaults>
</compile_context>

<pallas_src>
import functools

import jax
import jax.numpy as jnp
from jax import lax
from jax.experimental import pallas as pl
from jax.experimental.pallas import tpu as pltpu

_LANES = 512  # lane-dense last dim (multiple of 128)


def _round_up(x, m):
    return ((x + m - 1) // m) * m


def _sublane_multiple(dtype):
    # f32 -> 8, bf16 -> 16, int8/fp8 -> 32 (sublane packing).
    return max(8, 32 // jnp.dtype(dtype).itemsize)


def _default_num_shards():
    # Shard the leading "parallel" grid axis across TensorCores only on parts
    # that actually have 2 TCs per device (v7x, megacore v4/v5p).  On single-TC
    # v5e/v6e a second shard is just a serial outer loop that duplicates
    # init/finalize work, so use 1 there.
    try:
        dev = jax.devices()[0]
        if dev.platform != "tpu":
            return 1
        kind = str(getattr(dev, "device_kind", "")).lower()
        for tag in ("v7", "v4", "v5p"):
            if tag in kind:
                return 2
    except Exception:
        pass
    return 1


def _masked_l1_kernel(pred_ref, gt_ref, num_ref, den_ref, *,
                      rows, tiles_per_shard, block_rows):
    i = pl.program_id(0)  # shard ("parallel")
    j = pl.program_id(1)  # tile within shard ("arbitrary", reduction axis)

    # Each shard owns its own (1, 8, _LANES) output block (out index_map depends
    # only on i), so it stays resident in VMEM across the whole j axis and acts
    # as the accumulator; init exactly once per shard at j == 0.
    @pl.when(j == 0)
    def _init():
        num_ref[...] = jnp.zeros_like(num_ref)
        den_ref[...] = jnp.zeros_like(den_ref)

    # Unclamped global row offset of this tile.  The index_map clamps the DMA
    # window so it always starts in-bounds, but the mask below uses the
    # unclamped offset so duplicated / out-of-range rows contribute zero.
    row0 = (i * tiles_per_shard + j) * block_rows
    remaining = rows - row0

    pred = pred_ref[...].astype(jnp.float32)
    gt = gt_ref[...].astype(jnp.float32)

    row_ids = lax.broadcasted_iota(jnp.int32, pred.shape, 0)
    valid = (gt > 0.0) & (row_ids < remaining)

    err = jnp.where(valid, jnp.abs(pred - gt), 0.0)
    cnt = valid.astype(jnp.float32)

    # Row-group partial sums: (br, 512) -> (br//8, 8, 512) -> sum over the
    # leading axis.  Pure VALU vreg adds (no cross-lane XLU work); the tiny
    # (8, 512) per-shard accumulators are reduced once, in the wrapper.
    num_ref[...] += err.reshape(-1, 8, _LANES).sum(axis=0, keepdims=True)
    den_ref[...] += cnt.reshape(-1, 8, _LANES).sum(axis=0, keepdims=True)


def stereo_masked_l1_loss(pred, gt, *, block_rows=1024, num_shards=None):
    """Masked L1 stereo loss over valid pixels (gt > 0). pred/gt: any (same) shape."""
    assert pred.shape == gt.shape
    total = 1
    for d in pred.shape:
        total *= d
    if total == 0:
        return jnp.asarray(0.0, dtype=jnp.float32)

    if num_shards is None:
        num_shards = _default_num_shards()

    flat_pred = pred.reshape(-1)
    flat_gt = gt.reshape(-1)

    rows = total // _LANES
    tail = total - rows * _LANES

    # Sub-_LANES tail (< 512 elements): tiny jnp epilogue instead of padding /
    # copying the whole array.
    if tail:
        tp = flat_pred[rows * _LANES:].astype(jnp.float32)
        tg = flat_gt[rows * _LANES:].astype(jnp.float32)
        tmask = (tg > 0.0).astype(jnp.float32)
        tail_num = jnp.sum(jnp.abs(tp - tg) * tmask)
        tail_den = jnp.sum(tmask)
    else:
        tail_num = jnp.asarray(0.0, dtype=jnp.float32)
        tail_den = jnp.asarray(0.0, dtype=jnp.float32)

    if rows == 0:
        return tail_num / jnp.maximum(tail_den, 1.0)

    sub = max(_sublane_multiple(pred.dtype), _sublane_multiple(gt.dtype))
    br = max(sub, min(_round_up(block_rows, sub), _round_up(rows, sub)))
    n_blocks = pl.cdiv(rows, br)                 # in-bounds blocks (last may be partial)
    num_shards = max(1, min(num_shards, n_blocks))
    tiles_per_shard = pl.cdiv(n_blocks, num_shards)
    max_block = n_blocks - 1

    # No padding: when total % _LANES == 0 this is a view of the whole array.
    if tail:
        # TODO(synk): the prefix slice may materialize a copy of the bulk in
        # XLA; unavoidable without giving up the lane-dense (rows, 512) slab.
        bulk_pred = flat_pred[: rows * _LANES]
        bulk_gt = flat_gt[: rows * _LANES]
    else:
        bulk_pred = flat_pred
        bulk_gt = flat_gt
    pred2 = bulk_pred.reshape(rows, _LANES)
    gt2 = bulk_gt.reshape(rows, _LANES)

    def in_map(i, j):
        # Clamp so the DMA window always starts in-bounds; overshoot tiles
        # re-read the last block and are fully masked out in the kernel.
        return (jnp.minimum(i * tiles_per_shard + j, max_block), 0)

    out_map = lambda i, j: (i, 0, 0)

    in_bytes = rows * _LANES * (jnp.dtype(pred.dtype).itemsize +
                                jnp.dtype(gt.dtype).itemsize)
    cost = pl.CostEstimate(
        flops=8 * rows * _LANES,
        transcendentals=0,
        bytes_accessed=in_bytes + 2 * num_shards * 8 * _LANES * 4,
    )

    kernel = functools.partial(
        _masked_l1_kernel, rows=rows, tiles_per_shard=tiles_per_shard, block_rows=br)

    num_parts, den_parts = pl.pallas_call(
        kernel,
        out_shape=(
            jax.ShapeDtypeStruct((num_shards, 8, _LANES), jnp.float32),
            jax.ShapeDtypeStruct((num_shards, 8, _LANES), jnp.float32),
        ),
        grid_spec=pltpu.PrefetchScalarGridSpec(
            num_scalar_prefetch=0,
            grid=(num_shards, tiles_per_shard),
            in_specs=[
                pl.BlockSpec((br, _LANES), in_map),
                pl.BlockSpec((br, _LANES), in_map),
            ],
            out_specs=[
                pl.BlockSpec((1, 8, _LANES), out_map),
                pl.BlockSpec((1, 8, _LANES), out_map),
            ],
        ),
        compiler_params=pltpu.CompilerParams(
            dimension_semantics=("parallel", "arbitrary"),
            vmem_limit_bytes=40 * 1024 * 1024,
        ),
        cost_estimate=cost,
    )(pred2, gt2)

    num = jnp.sum(num_parts) + tail_num
    den = jnp.sum(den_parts) + tail_den
    return num / jnp.maximum(den, 1.0)


def _reference_loss(pred, gt):
    pred = pred.astype(jnp.float32)
    gt = gt.astype(jnp.float32)
    mask = (gt > 0.0).astype(jnp.float32)
    num = jnp.sum(jnp.abs(pred - gt) * mask)
    den = jnp.maximum(jnp.sum(mask), 1.0)
    return num / den


if __name__ == "__main__":
    key = jax.random.PRNGKey(0)
    k1, k2, k3, k4, k5, k6, k7, k8 = jax.random.split(key, 8)

    # 1) Small NCHW example (element count divisible by the 512-lane slab width).
    N, C, H, W = 2, 1, 16, 16
    pred = jax.random.normal(k1, (N, C, H, W), dtype=jnp.float32)
    gt = jax.random.uniform(k2, (N, C, H, W), dtype=jnp.float32, minval=0.0, maxval=10.0)
    gt = jnp.where(jax.random.uniform(k3, (N, C, H, W)) < 0.2, 0.0, gt)
    loss = jax.block_until_ready(stereo_masked_l1_loss(pred, gt))
    ref = _reference_loss(pred, gt)
    assert jnp.allclose(loss, ref, rtol=1e-5, atol=1e-5), (loss, ref)

    # 2) Ragged shape: exercises the in-kernel partial-tile row mask and the
    #    < 512-element jnp tail epilogue (no wrapper-side padding).
    pred2 = jax.random.normal(k4, (2, 3, 33, 37), dtype=jnp.float32)
    gt2 = jax.random.uniform(k5, (2, 3, 33, 37), dtype=jnp.float32, minval=0.0, maxval=10.0)
    gt2 = jnp.where(jax.random.uniform(k6, (2, 3, 33, 37)) < 0.2, 0.0, gt2)
    loss2 = jax.block_until_ready(stereo_masked_l1_loss(pred2, gt2))
    ref2 = _reference_loss(pred2, gt2)
    assert jnp.allclose(loss2, ref2, rtol=1e-5, atol=1e-5), (loss2, ref2)

    # 3) Multi-tile + sharded grid with overshoot tiles (clamped + masked) and a
    #    partial last block: 17 rows, 8-row blocks, 2 shards -> 2x2 tile slots
    #    covering 3 in-bounds blocks.
    pred3 = jax.random.normal(k7, (17, _LANES), dtype=jnp.float32)
    gt3 = jax.random.uniform(k8, (17, _LANES), dtype=jnp.float32, minval=0.0, maxval=10.0)
    gt3 = jnp.where(gt3 < 2.0, 0.0, gt3)
    loss3 = jax.block_until_ready(
        stereo_masked_l1_loss(pred3, gt3, block_rows=8, num_shards=2))
    ref3 = _reference_loss(pred3, gt3)
    assert jnp.allclose(loss3, ref3, rtol=1e-5, atol=1e-5), (loss3, ref3)

    # 4) bf16 inputs: block rows round to the (16, 128) bf16 tile.
    predb = pred.astype(jnp.bfloat16)
    gtb = gt.astype(jnp.bfloat16)
    lossb = jax.block_until_ready(stereo_masked_l1_loss(predb, gtb))
    refb = _reference_loss(predb, gtb)
    assert jnp.allclose(lossb, refb, rtol=1e-4, atol=1e-4), (lossb, refb)

    print("KERNEL_OK")
</pallas_src>

<mosaic_0001>
module attributes {stable_mosaic.version = 11 : i64} {
  func.func @_masked_l1_kernel(%arg0: i32, %arg1: i32, %arg2: memref<8x512xf32, #tpu.memory_space<vmem>>, %arg3: memref<8x512xf32, #tpu.memory_space<vmem>>, %arg4: memref<1x8x512xf32, #tpu.memory_space<vmem>>, %arg5: memref<1x8x512xf32, #tpu.memory_space<vmem>>) attributes {dimension_semantics = [#tpu.dimension_semantics<parallel>, #tpu.dimension_semantics<arbitrary>], iteration_bounds = array<i64: 1, 1>, scalar_prefetch = 0 : i64, scratch_operands = 0 : i64, tpu.core_type = #tpu.core_type<tc>, window_params = [{transform_indices = @transform_0, window_bounds = array<i64: 8, 512>}, {transform_indices = @transform_1, window_bounds = array<i64: 8, 512>}, {transform_indices = @transform_2, window_bounds = array<i64: 1, 8, 512>}, {transform_indices = @transform_3, window_bounds = array<i64: 1, 8, 512>}]} {
    %c0_i32 = arith.constant 0 : i32
    %0 = arith.cmpi eq, %arg1, %c0_i32 : i32
    %1 = arith.extui %0 : i1 to i32
    %c0_i32_0 = arith.constant 0 : i32
    %2 = arith.cmpi ne, %1, %c0_i32_0 : i32
    scf.if %2 {
      %cst_20 = arith.constant 0.000000e+00 : f32
      %33 = vector.broadcast %cst_20 : f32 to vector<1x8x512xf32>
      %c0_21 = arith.constant 0 : index
      %c0_22 = arith.constant 0 : index
      %c0_23 = arith.constant 0 : index
      %34 = vector.load %arg4[%c0_21, %c0_22, %c0_23] : memref<1x8x512xf32, #tpu.memory_space<vmem>>, vector<1x8x512xf32>
      tpu.vector_store %arg4[%c0_21, %c0_22, %c0_23], %33 {strides = array<i32>} : memref<1x8x512xf32, #tpu.memory_space<vmem>>, vector<1x8x512xf32>,
      %cst_24 = arith.constant 0.000000e+00 : f32
      %35 = vector.broadcast %cst_24 : f32 to vector<1x8x512xf32>
      %c0_25 = arith.constant 0 : index
      %c0_26 = arith.constant 0 : index
      %c0_27 = arith.constant 0 : index
      %36 = vector.load %arg5[%c0_25, %c0_26, %c0_27] : memref<1x8x512xf32, #tpu.memory_space<vmem>>, vector<1x8x512xf32>
      tpu.vector_store %arg5[%c0_25, %c0_26, %c0_27], %35 {strides = array<i32>} : memref<1x8x512xf32, #tpu.memory_space<vmem>>, vector<1x8x512xf32>,
    } else {
    }
    %c1_i32 = arith.constant 1 : i32
    %3 = arith.muli %arg0, %c1_i32 : i32
    %4 = arith.addi %3, %arg1 : i32
    %c8_i32 = arith.constant 8 : i32
    %5 = arith.muli %4, %c8_i32 : i32
    %c1_i32_1 = arith.constant 1 : i32
    %6 = arith.subi %c1_i32_1, %5 : i32
    %c0 = arith.constant 0 : index
    %c0_2 = arith.constant 0 : index
    %7 = vector.load %arg2[%c0, %c0_2] : memref<8x512xf32, #tpu.memory_space<vmem>>, vector<8x512xf32>
    %c0_3 = arith.constant 0 : index
    %c0_4 = arith.constant 0 : index
    %8 = vector.load %arg3[%c0_3, %c0_4] : memref<8x512xf32, #tpu.memory_space<vmem>>, vector<8x512xf32>
    %9 = tpu.iota {dimensions = array<i32: 0>} : vector<8x512xi32>
    %cst = arith.constant 0.000000e+00 : f32
    %10 = vector.broadcast %cst : f32 to vector<8x512xf32>
    %11 = arith.cmpf ogt, %8, %10 : vector<8x512xf32>
    %12 = vector.broadcast %6 : i32 to vector<8x512xi32>
    %13 = arith.cmpi slt, %9, %12 : vector<8x512xi32>
    %14 = arith.andi %11, %13 : vector<8x512xi1>
    %15 = arith.subf %7, %8 : vector<8x512xf32>
    %16 = math.absf %15 : vector<8x512xf32>
    %cst_5 = arith.constant 0.000000e+00 : f32
    %17 = vector.broadcast %cst_5 : f32 to vector<8x512xf32>
    %18 = arith.select %14, %16, %17 : vector<8x512xi1>, vector<8x512xf32>
    %19 = arith.extui %14 : vector<8x512xi1> to vector<8x512xi32>
    %20 = arith.sitofp %19 : vector<8x512xi32> to vector<8x512xf32>
    %c0_6 = arith.constant 0 : index
    %c0_7 = arith.constant 0 : index
    %c0_8 = arith.constant 0 : index
    %21 = vector.load %arg4[%c0_6, %c0_7, %c0_8] : memref<1x8x512xf32, #tpu.memory_space<vmem>>, vector<1x8x512xf32>
    %22 = vector.shape_cast %18 : vector<8x512xf32> to vector<1x8x512xf32>
    %cst_9 = arith.constant dense<0.000000e+00> : vector<8x512xf32>
    %23 = vector.multi_reduction <add>, %22, %cst_9 [0] : vector<1x8x512xf32> to vector<8x512xf32>
    %24 = vector.shape_cast %23 : vector<8x512xf32> to vector<1x8x512xf32>
    %25 = arith.addf %21, %24 : vector<1x8x512xf32>
    %c0_10 = arith.constant 0 : index
    %c0_11 = arith.constant 0 : index
    %c0_12 = arith.constant 0 : index
    %26 = vector.load %arg4[%c0_10, %c0_11, %c0_12] : memref<1x8x512xf32, #tpu.memory_space<vmem>>, vector<1x8x512xf32>
    tpu.vector_store %arg4[%c0_10, %c0_11, %c0_12], %25 {strides = array<i32>} : memref<1x8x512xf32, #tpu.memory_space<vmem>>, vector<1x8x512xf32>,
    %c0_13 = arith.constant 0 : index
    %c0_14 = arith.constant 0 : index
    %c0_15 = arith.constant 0 : index
    %27 = vector.load %arg5[%c0_13, %c0_14, %c0_15] : memref<1x8x512xf32, #tpu.memory_space<vmem>>, vector<1x8x512xf32>
    %28 = vector.shape_cast %20 : vector<8x512xf32> to vector<1x8x512xf32>
    %cst_16 = arith.constant dense<0.000000e+00> : vector<8x512xf32>
    %29 = vector.multi_reduction <add>, %28, %cst_16 [0] : vector<1x8x512xf32> to vector<8x512xf32>
    %30 = vector.shape_cast %29 : vector<8x512xf32> to vector<1x8x512xf32>
    %31 = arith.addf %27, %30 : vector<1x8x512xf32>
    %c0_17 = arith.constant 0 : index
    %c0_18 = arith.constant 0 : index
    %c0_19 = arith.constant 0 : index
    %32 = vector.load %arg5[%c0_17, %c0_18, %c0_19] : memref<1x8x512xf32, #tpu.memory_space<vmem>>, vector<1x8x512xf32>
    tpu.vector_store %arg5[%c0_17, %c0_18, %c0_19], %31 {strides = array<i32>} : memref<1x8x512xf32, #tpu.memory_space<vmem>>, vector<1x8x512xf32>,
    return
  }
  func.func @transform_0(%arg0: i32, %arg1: i32) -> (i32, i32) {
    %c1_i32 = arith.constant 1 : i32
    %0 = arith.muli %arg0, %c1_i32 : i32
    %1 = arith.addi %0, %arg1 : i32
    %c0_i32 = arith.constant 0 : i32
    %2 = arith.minsi %1, %c0_i32 : i32
    %c0_i32_0 = arith.constant 0 : i32
    %c0_i32_1 = arith.constant 0 : i32
    return %2, %c0_i32_0 : i32, i32
  }
  func.func @transform_1(%arg0: i32, %arg1: i32) -> (i32, i32) {
    %c1_i32 = arith.constant 1 : i32
    %0 = arith.muli %arg0, %c1_i32 : i32
    %1 = arith.addi %0, %arg1 : i32
    %c0_i32 = arith.constant 0 : i32
    %2 = arith.minsi %1, %c0_i32 : i32
    %c0_i32_0 = arith.constant 0 : i32
    %c0_i32_1 = arith.constant 0 : i32
    return %2, %c0_i32_0 : i32, i32
  }
  func.func @transform_2(%arg0: i32, %arg1: i32) -> (i32, i32, i32) {
    %c0_i32 = arith.constant 0 : i32
    %c0_i32_0 = arith.constant 0 : i32
    %c0_i32_1 = arith.constant 0 : i32
    return %arg0, %c0_i32, %c0_i32_0 : i32, i32, i32
  }
  func.func @transform_3(%arg0: i32, %arg1: i32) -> (i32, i32, i32) {
    %c0_i32 = arith.constant 0 : i32
    %c0_i32_0 = arith.constant 0 : i32
    %c0_i32_1 = arith.constant 0 : i32
    return %arg0, %c0_i32, %c0_i32_0 : i32, i32, i32
  }
}

</mosaic_0001>

<llo_original>
// kernel: tpu_custom_call.1
$region0: #{tpu_custom_call.1}
  #allocation0 [shape = 'u32[]', space=smem, size = 0x4, offset = 0x4, fixed_abs, tag = 'smem constant byte address 0x4 - core index']
  #allocation1 [shape = 'u32[72,128]{1,0:T(1,128)}', space=vmem, size = 0x9000, scoped, tag = 'internal scratch']
  %s0 = inlined_call_operand.hbm [shape: f32[1,512], index: 0, kind: input, shape index: {}]
  %s1 = inlined_call_operand.hbm [shape: f32[1,512], index: 1, kind: input, shape index: {}]
  %s2 = inlined_call_operand.hbm [shape: f32[1,8,512], index: 2, kind: output, shape index: {0}]
  %s3 = inlined_call_operand.hbm [shape: f32[1,8,512], index: 3, kind: output, shape index: {1}]
  %4 = xla_tuple %s2, %s3
  %s5 = sld [smem:[#allocation0]]
  $region38: #{tpu_custom_call.1} parent=0
    _
  %s7 = ssub.s32 1, %s5
  %s8 = scalar_select 0, %s7, %s5
  $region1: #{tpu_custom_call.1} parent=0
    #allocation2 [shape = 'u8[16384]{0}', space=vmem, size = 0x4000, scoped, tag = 'input window, operand 0, single buffered']
    #allocation3 [shape = 's32[1]{0}', space=sflag, size = 0x4, scoped, tag = 'scoped memory for tpu_custom_call.1']
    #allocation4 [shape = 's32[1]{0}', space=sflag, size = 0x4, scoped, tag = 'scoped memory for tpu_custom_call.1']
    #allocation5 [shape = 'u8[16384]{0}', space=vmem, size = 0x4000, scoped, tag = 'input window, operand 1, single buffered']
    #allocation6 [shape = 's32[1]{0}', space=sflag, size = 0x4, scoped, tag = 'scoped memory for tpu_custom_call.1']
    #allocation7 [shape = 'u8[16384]{0}', space=vmem, size = 0x4000, scoped, tag = 'output window, operand 0, single buffered']
    #allocation8 [shape = 'u8[16384]{0}', space=vmem, size = 0x4000, scoped, tag = 'output window, operand 1, single buffered']
    #allocation9 [shape = 's32[1]{0}', space=sflag, size = 0x4, scoped, tag = 'scoped memory for tpu_custom_call.1']
    %9 = vsyncpa [#allocation3], 0
    %10 = vsyncpa [#allocation6], 0
    %11 = vsyncpa [#allocation4], 0
    %12 = vsyncpa [#allocation9], 0
    // Predicated region
    $region2: #{tpu_custom_call.1} parent=1 // pred_check
      _
    $region3: #{tpu_custom_call.1} parent=1 // pred_check_branch
      %14 = sbr.rel (0) target = $region5
    $region4: #{tpu_custom_call.1} parent=1 // pred_region
      %s15 = sadd.s32 0, 0
      %p16 = scmp.lt.s32.totalorder %s15, 0
      %s17 = scalar_select %p16, %s15, 0
      %s18 = smul.u32 8, %s17
      %s19 = ssub.s32 1, %s18
      %s20 = smul.u32 %s19, 4
      %s21 = ssub.s32 32, %s20
      %s22 = sshll.u32 %s21, 4
      %23 = vsyncadd [#allocation3], %s22
      %p24 = scmp.ne.s32.totalorder 0, %s20
      %s25 = smul.addr %s18, 4
      %s26 = scalar_lea.hbm %s0, %s25
      %s27 = smul.u32 4, %s19
      %s28 = sshll.u32 %s26, 4
      %s29 = int_to_ptr.hbm [resolvable:$true] %s28
      %s30 = sshll.u32 [#allocation2], 4
      %s31 = int_to_ptr.vmem [resolvable:$true] %s30
      %s32 = sshll.u32 %s27, 4
      %36 = dma.hbm_to_vmem [thread:$0]  (%p24), %s29, %s32, %s31, [#allocation3], 64, 64, 4
    $region5: #{tpu_custom_call.1} parent=1 // pred_fallthru
      _
    // Predicated region
    $region6: #{tpu_custom_call.1} parent=1 // pred_check
      _
    $region7: #{tpu_custom_call.1} parent=1 // pred_check_branch
      %38 = sbr.rel (0) target = $region9
    $region8: #{tpu_custom_call.1} parent=1 // pred_region
      %s39 = sadd.s32 0, 0
      %p40 = scmp.lt.s32.totalorder %s39, 0
      %s41 = scalar_select %p40, %s39, 0
      %s42 = smul.u32 8, %s41
      %s43 = ssub.s32 1, %s42
      %s44 = smul.u32 %s43, 4
      %s45 = ssub.s32 32, %s44
      %s46 = sshll.u32 %s45, 4
      %47 = vsyncadd [#allocation6], %s46
      %p48 = scmp.ne.s32.totalorder 0, %s44
      %s49 = smul.addr %s42, 4
      %s50 = scalar_lea.hbm %s1, %s49
      %s51 = smul.u32 4, %s43
      %s52 = sshll.u32 %s50, 4
      %s53 = int_to_ptr.hbm [resolvable:$true] %s52
      %s54 = sshll.u32 [#allocation5], 4
      %s55 = int_to_ptr.vmem [resolvable:$true] %s54
      %s56 = sshll.u32 %s51, 4
      %60 = dma.hbm_to_vmem [thread:$0]  (%p48), %s53, %s56, %s55, [#allocation6], 64, 64, 4
    $region9: #{tpu_custom_call.1} parent=1 // pred_fallthru
      _
    // Predicated region
    $region10: #{tpu_custom_call.1} parent=1 // pred_check
      _
    $region11: #{tpu_custom_call.1} parent=1 // pred_check_branch
      %62 = sbr.rel (0) target = $region13
    $region12: #{tpu_custom_call.1} parent=1 // pred_region
      %64 = dma.done [#allocation3], 512
    $region13: #{tpu_custom_call.1} parent=1 // pred_fallthru
      _
    // Predicated region
    $region14: #{tpu_custom_call.1} parent=1 // pred_check
      _
    $region15: #{tpu_custom_call.1} parent=1 // pred_check_branch
      %66 = sbr.rel (0) target = $region17
    $region16: #{tpu_custom_call.1} parent=1 // pred_region
      %68 = dma.done [#allocation6], 512
    $region17: #{tpu_custom_call.1} parent=1 // pred_fallthru
      _
    %s69 = sadd.s32 0, 0
    %p70 = scmp.lt.s32.totalorder %s69, 0
    %s71 = scalar_select %p70, %s69, 0
    %s72 = smul.u32 8, %s71
    %s73 = ssub.s32 1, %s72
    %s74 = smul.u32 %s73, 4
    %s75 = sadd.s32 0, 0
    %p76 = scmp.lt.s32.totalorder %s75, 0
    %s77 = scalar_select %p76, %s75, 0
    %s78 = smul.u32 8, %s77
    %s79 = ssub.s32 1, %s78
    %s80 = smul.u32 %s79, 4
    %p81 = scmp.eq.s32.totalorder 0, 0
    // Predicated region
    $region18: #{tpu_custom_call.1} parent=1 // pred_check
      %p82 = pneg %p81
    $region19: #{tpu_custom_call.1} parent=1 // pred_check_branch
      %84 = sbr.rel (%p82) target = $region21
    $region20: #{tpu_custom_call.1} parent=1 // pred_region
      %85 = vst [vmem:[#allocation7] sm:$0xff] 0.0
      %86 = vst [vmem:[#allocation7 + $0x8] sm:$0xff] 0.0
      %87 = vst [vmem:[#allocation7 + $0x10] sm:$0xff] 0.0
      %88 = vst [vmem:[#allocation7 + $0x18] sm:$0xff] 0.0
      %89 = vst [vmem:[#allocation8] sm:$0xff] 0.0
      %90 = vst [vmem:[#allocation8 + $0x8] sm:$0xff] 0.0
      %91 = vst [vmem:[#allocation8 + $0x10] sm:$0xff] 0.0
      %92 = vst [vmem:[#allocation8 + $0x18] sm:$0xff] 0.0
    $region21: #{tpu_custom_call.1} parent=1 // pred_fallthru
      _
    %s93 = sadd.s32 0, 0
    %s94 = smul.u32 %s93, 8
    %s95 = ssub.s32 1, %s94
    %v96 = vld [vmem:[#allocation2] sm:$0xf]
    %v97 = vld [vmem:[#allocation2 + $0x4] sm:$0xf]
    %v98 = vld [vmem:[#allocation2 + $0x8] sm:$0xf]
    %v99 = vld [vmem:[#allocation2 + $0xc] sm:$0xf]
    %v100 = vld [vmem:[#allocation2 + $0x10] sm:$0xf]
    %v101 = vld [vmem:[#allocation2 + $0x14] sm:$0xf]
    %v102 = vld [vmem:[#allocation2 + $0x18] sm:$0xf]
    %v103 = vld [vmem:[#allocation2 + $0x1c] sm:$0xf]
    %v104 = vld [vmem:[#allocation5] sm:$0xf]
    %v105 = vld [vmem:[#allocation5 + $0x4] sm:$0xf]
    %v106 = vld [vmem:[#allocation5 + $0x8] sm:$0xf]
    %v107 = vld [vmem:[#allocation5 + $0xc] sm:$0xf]
    %v108 = vld [vmem:[#allocation5 + $0x10] sm:$0xf]
    %v109 = vld [vmem:[#allocation5 + $0x14] sm:$0xf]
    %v110 = vld [vmem:[#allocation5 + $0x18] sm:$0xf]
    %v111 = vld [vmem:[#allocation5 + $0x1c] sm:$0xf]
    %v112 = vlaneseq
    %v113 = vshrl.u32 %v112, 7
    %vm114 = vcmp.gt.f32.partialorder %v104, 0.0
    %vm115 = vcmp.gt.f32.partialorder %v105, 0.0
    %vm116 = vcmp.gt.f32.partialorder %v106, 0.0
    %vm117 = vcmp.gt.f32.partialorder %v107, 0.0
    %vm118 = vcmp.gt.f32.partialorder %v108, 0.0
    %vm119 = vcmp.gt.f32.partialorder %v109, 0.0
    %vm120 = vcmp.gt.f32.partialorder %v110, 0.0
    %vm121 = vcmp.gt.f32.partialorder %v111, 0.0
    %v122 = vstv %s95
    %vm123 = vcmp.lt.s32.totalorder %v113, %v122
    %v124 = vsel %vm123, 1, 0
    %v125 = vperm.slane %v124, 0
    %v126 = vperm.slane %v124, 1
    %v127 = vperm.slane %v124, 2
    %v128 = vperm.slane %v124, 3
    %v129 = vperm.slane %v124, 4
    %v130 = vperm.slane %v124, 5
    %v131 = vperm.slane %v124, 6
    %v132 = vperm.slane %v124, 7
    %vm133 = vcmp.ne.s32.totalorder %v125, 0
    %vm134 = vcmp.ne.s32.totalorder %v126, 0
    %vm135 = vcmp.ne.s32.totalorder %v127, 0
    %vm136 = vcmp.ne.s32.totalorder %v128, 0
    %vm137 = vcmp.ne.s32.totalorder %v129, 0
    %vm138 = vcmp.ne.s32.totalorder %v130, 0
    %vm139 = vcmp.ne.s32.totalorder %v131, 0
    %vm140 = vcmp.ne.s32.totalorder %v132, 0
    %vm141 = vmand %vm114, %vm133
    %vm142 = vmand %vm115, %vm134
    %vm143 = vmand %vm116, %vm135
    %vm144 = vmand %vm117, %vm136
    %vm145 = vmand %vm118, %vm137
    %vm146 = vmand %vm119, %vm138
    %vm147 = vmand %vm120, %vm139
    %vm148 = vmand %vm121, %vm140
    %v149 = vsub.f32 %v96, %v104
    %v150 = vsub.f32 %v97, %v105
    %v151 = vsub.f32 %v98, %v106
    %v152 = vsub.f32 %v99, %v107
    %v153 = vsub.f32 %v100, %v108
    %v154 = vsub.f32 %v101, %v109
    %v155 = vsub.f32 %v102, %v110
    %v156 = vsub.f32 %v103, %v111
    %v157 = vand.u32 2147483647, %v149
    %v158 = vand.u32 2147483647, %v150
    %v159 = vand.u32 2147483647, %v151
    %v160 = vand.u32 2147483647, %v152
    %v161 = vand.u32 2147483647, %v153
    %v162 = vand.u32 2147483647, %v154
    %v163 = vand.u32 2147483647, %v155
    %v164 = vand.u32 2147483647, %v156
    %v165 = vsel %vm141, %v157, 0.0
    %v166 = vsel %vm142, %v158, 0.0
    %v167 = vsel %vm143, %v159, 0.0
    %v168 = vsel %vm144, %v160, 0.0
    %v169 = vsel %vm145, %v161, 0.0
    %v170 = vsel %vm146, %v162, 0.0
    %v171 = vsel %vm147, %v163, 0.0
    %v172 = vsel %vm148, %v164, 0.0
    %v173 = vsel %vm141, 1, 0
    %v174 = vsel %vm142, 1, 0
    %v175 = vsel %vm143, 1, 0
    %v176 = vsel %vm144, 1, 0
    %v177 = vsel %vm145, 1, 0
    %v178 = vsel %vm146, 1, 0
    %v179 = vsel %vm147, 1, 0
    %v180 = vsel %vm148, 1, 0
    %v181 = vcvt.s32.f32 %v173
    %v182 = vcvt.s32.f32 %v174
    %v183 = vcvt.s32.f32 %v175
    %v184 = vcvt.s32.f32 %v176
    %v185 = vcvt.s32.f32 %v177
    %v186 = vcvt.s32.f32 %v178
    %v187 = vcvt.s32.f32 %v179
    %v188 = vcvt.s32.f32 %v180
    %v189 = vld [vmem:[#allocation7] sm:$0xff]
    %v190 = vld [vmem:[#allocation7 + $0x8] sm:$0xff]
    %v191 = vld [vmem:[#allocation7 + $0x10] sm:$0xff]
    %v192 = vld [vmem:[#allocation7 + $0x18] sm:$0xff]
    %v193 = vadd.f32 %v165, 0.0
    %v194 = vadd.f32 %v166, 0.0
    %v195 = vadd.f32 %v167, 0.0
    %v196 = vadd.f32 %v168, 0.0
    %v197 = vadd.f32 %v169, 0.0
    %v198 = vadd.f32 %v170, 0.0
    %v199 = vadd.f32 %v171, 0.0
    %v200 = vadd.f32 %v172, 0.0
    %209 = vst [vmem:[#allocation1] ss:$9 sm:$0xff] %v193
    %s210 = scalar_lea.vmem [#allocation1], 1
    %211 = vst [vmem:[%s210] ss:$9 sm:$0xff] %v194
    %s212 = scalar_lea.vmem [#allocation1], 2
    %213 = vst [vmem:[%s212] ss:$9 sm:$0xff] %v195
    %s214 = scalar_lea.vmem [#allocation1], 3
    %215 = vst [vmem:[%s214] ss:$9 sm:$0xff] %v196
    %s216 = scalar_lea.vmem [#allocation1], 4
    %217 = vst [vmem:[%s216] ss:$9 sm:$0xff] %v197
    %s218 = scalar_lea.vmem [#allocation1], 5
    %219 = vst [vmem:[%s218] ss:$9 sm:$0xff] %v198
    %s220 = scalar_lea.vmem [#allocation1], 6
    %221 = vst [vmem:[%s220] ss:$9 sm:$0xff] %v199
    %s222 = scalar_lea.vmem [#allocation1], 7
    %223 = vst [vmem:[%s222] ss:$9 sm:$0xff] %v200
    %v224 = vld [vmem:[#allocation1] sm:$0xff]
    %v225 = vld [vmem:[#allocation1 + $0x9] sm:$0xff]
    %v226 = vld [vmem:[#allocation1 + $0x12] sm:$0xff]
    %v227 = vld [vmem:[#allocation1 + $0x1b] sm:$0xff]
    %v232 = vadd.f32 %v189, %v224
    %v233 = vadd.f32 %v190, %v225
    %v234 = vadd.f32 %v191, %v226
    %v235 = vadd.f32 %v192, %v227
    %236 = vst [vmem:[#allocation7] sm:$0xff] %v232
    %237 = vst [vmem:[#allocation7 + $0x8] sm:$0xff] %v233
    %238 = vst [vmem:[#allocation7 + $0x10] sm:$0xff] %v234
    %239 = vst [vmem:[#allocation7 + $0x18] sm:$0xff] %v235
    %v240 = vld [vmem:[#allocation8] sm:$0xff]
    %v241 = vld [vmem:[#allocation8 + $0x8] sm:$0xff]
    %v242 = vld [vmem:[#allocation8 + $0x10] sm:$0xff]
    %v243 = vld [vmem:[#allocation8 + $0x18] sm:$0xff]
    %v244 = vadd.f32 %v181, 0.0
    %v245 = vadd.f32 %v182, 0.0
    %v246 = vadd.f32 %v183, 0.0
    %v247 = vadd.f32 %v184, 0.0
    %v248 = vadd.f32 %v185, 0.0
    %v249 = vadd.f32 %v186, 0.0
    %v250 = vadd.f32 %v187, 0.0
    %v251 = vadd.f32 %v188, 0.0
    %260 = vst [vmem:[#allocation1] ss:$9 sm:$0xff] %v244
    %s261 = scalar_lea.vmem [#allocation1], 1
    %262 = vst [vmem:[%s261] ss:$9 sm:$0xff] %v245
    %s263 = scalar_lea.vmem [#allocation1], 2
    %264 = vst [vmem:[%s263] ss:$9 sm:$0xff] %v246
    %s265 = scalar_lea.vmem [#allocation1], 3
    %266 = vst [vmem:[%s265] ss:$9 sm:$0xff] %v247
    %s267 = scalar_lea.vmem [#allocation1], 4
    %268 = vst [vmem:[%s267] ss:$9 sm:$0xff] %v248
    %s269 = scalar_lea.vmem [#allocation1], 5
    %270 = vst [vmem:[%s269] ss:$9 sm:$0xff] %v249
    %s271 = scalar_lea.vmem [#allocation1], 6
    %272 = vst [vmem:[%s271] ss:$9 sm:$0xff] %v250
    %s273 = scalar_lea.vmem [#allocation1], 7
    %274 = vst [vmem:[%s273] ss:$9 sm:$0xff] %v251
    %v275 = vld [vmem:[#allocation1] sm:$0xff]
    %v276 = vld [vmem:[#allocation1 + $0x9] sm:$0xff]
    %v277 = vld [vmem:[#allocation1 + $0x12] sm:$0xff]
    %v278 = vld [vmem:[#allocation1 + $0x1b] sm:$0xff]
    %v283 = vadd.f32 %v240, %v275
    %v284 = vadd.f32 %v241, %v276
    %v285 = vadd.f32 %v242, %v277
    %v286 = vadd.f32 %v243, %v278
    %287 = vst [vmem:[#allocation8] sm:$0xff] %v283
    %288 = vst [vmem:[#allocation8 + $0x8] sm:$0xff] %v284
    %289 = vst [vmem:[#allocation8 + $0x10] sm:$0xff] %v285
    %290 = vst [vmem:[#allocation8 + $0x18] sm:$0xff] %v286
    // Predicated region
    $region22: #{tpu_custom_call.1} parent=1 // pred_check
      _
    $region23: #{tpu_custom_call.1} parent=1 // pred_check_branch
      %292 = sbr.rel (0) target = $region25
    $region24: #{tpu_custom_call.1} parent=1 // pred_region
      %294 = vsyncadd [#allocation4], 0
      %s296 = sshll.u32 [#allocation7], 4
      %s297 = int_to_ptr.vmem [resolvable:$true] %s296
      %s298 = sshll.u32 %s2, 4
      %s299 = int_to_ptr.hbm [resolvable:$true] %s298
      %301 = dma.vmem_to_hbm [thread:$0]  %s297, 512, %s299, [#allocation4]
    $region25: #{tpu_custom_call.1} parent=1 // pred_fallthru
      _
    // Predicated region
    $region26: #{tpu_custom_call.1} parent=1 // pred_check
      _
    $region27: #{tpu_custom_call.1} parent=1 // pred_check_branch
      %303 = sbr.rel (0) target = $region29
    $region28: #{tpu_custom_call.1} parent=1 // pred_region
      %305 = vsyncadd [#allocation9], 0
      %s307 = sshll.u32 [#allocation8], 4
      %s308 = int_to_ptr.vmem [resolvable:$true] %s307
      %s309 = sshll.u32 %s3, 4
      %s310 = int_to_ptr.hbm [resolvable:$true] %s309
      %312 = dma.vmem_to_hbm [thread:$0]  %s308, 512, %s310, [#allocation9]
    $region29: #{tpu_custom_call.1} parent=1 // pred_fallthru
      _
    // Predicated region
    $region30: #{tpu_custom_call.1} parent=1 // pred_check
      _
    $region31: #{tpu_custom_call.1} parent=1 // pred_check_branch
      %314 = sbr.rel (0) target = $region33
    $region32: #{tpu_custom_call.1} parent=1 // pred_region
      %316 = dma.done [#allocation4], 512
    $region33: #{tpu_custom_call.1} parent=1 // pred_fallthru
      _
    // Predicated region
    $region34: #{tpu_custom_call.1} parent=1 // pred_check
      _
    $region35: #{tpu_custom_call.1} parent=1 // pred_check_branch
      %318 = sbr.rel (0) target = $region37
    $region36: #{tpu_custom_call.1} parent=1 // pred_region
      %320 = dma.done [#allocation9], 512
    $region37: #{tpu_custom_call.1} parent=1 // pred_fallthru
      _
    %321 = vsyncpa [#allocation3], 1
    %322 = vsyncpa [#allocation6], 1
    %323 = vsyncpa [#allocation4], 1
    %324 = vsyncpa [#allocation9], 1

</llo_original>
